<compile_context>
chip_gen: v7x
topology: tpu7x:2x2x1
jax: 0.10.0
libtpu: 0.0.40
codegen_flags: <defaults>
</compile_context>

<pallas_src>
import jax
import jax.numpy as jnp
from jax.experimental import pallas as pl
from jax.experimental.pallas import tpu as pltpu

BN_EPS = 4e-5                 # nn.BatchNorm2d(eps=4e-05)
LANE = 128
MAX_TILE_M = 65536            # lanes per spatial tile (big tiles amortize grid-step overhead)
TILED_BLOCK_BUDGET = 24 * 1024 * 1024   # double-buffered block budget for the tiled path
TILED_VMEM_LIMIT = 32 * 1024 * 1024     # explicit scoped-VMEM limit (v5e default is only 16 MiB)


def _round_up(x, m):
    return (x + m - 1) // m * m


def _vmem_capacity_bytes():
    try:
        return int(pltpu.get_tpu_info().vmem_capacity_bytes)
    except Exception:
        return 64 * 1024 * 1024   # conservative fallback (v7x physical VMEM)


# ----------------------------- kernels ---------------------------------------------


def _make_stats_kernel(hw, tile_m, n_mi, needs_mask):
    """Pass 1: per-(image, m_outer) partial sums of y = W @ x and y*y."""

    def kernel(x_ref, w_ref, sum_ref, sq_ref):
        # x_ref: (1, Cin, tile_m)   w_ref: (Cout, Cin)
        # sum_ref / sq_ref: (1, 1, Cout, 1) accumulators, resident across the mi axis.
        @pl.when(pl.program_id(2) == 0)
        def _():
            sum_ref[...] = jnp.zeros_like(sum_ref)
            sq_ref[...] = jnp.zeros_like(sq_ref)

        # 1x1 conv == matmul: channels on sublanes, spatial on lanes (lane-dense).
        y = jnp.dot(w_ref[...], x_ref[0].astype(jnp.float32),
                    preferred_element_type=jnp.float32)              # (Cout, tile_m)
        if needs_mask:  # static: last spatial block is partial -> zero the garbage tail
            m_idx = pl.program_id(1) * n_mi + pl.program_id(2)
            valid = hw - m_idx * tile_m
            lane = jax.lax.broadcasted_iota(jnp.int32, y.shape, 1)
            y = jnp.where(lane < valid, y, 0.0)
        sum_ref[...] += jnp.sum(y, axis=1, keepdims=True)[None, None]
        sq_ref[...] += jnp.sum(y * y, axis=1, keepdims=True)[None, None]

    return kernel


def _normalize_kernel(x_ref, w_ref, shift_ref, o_ref):
    """Pass 2: y = (scale*W) @ x ; out = relu(y + shift). Lane-dense store."""
    # x_ref: (1, Cin, tile_m)  w_ref: (Cout, Cin) with BN scale folded in
    # shift_ref: (Cout, 1)     o_ref: (1, Cout, tile_m)
    y = jnp.dot(w_ref[...], x_ref[0].astype(jnp.float32),
                preferred_element_type=jnp.float32)
    o_ref[0] = jnp.maximum(y + shift_ref[...], 0.0).astype(o_ref.dtype)


def _make_fused_kernel(n_imgs, c_out, hw, bn_eps):
    """Fused single-invocation path: x resident in VMEM; stats + affine + ReLU in one kernel."""
    m_total = n_imgs * hw

    def kernel(x_ref, w_ref, gamma_ref, beta_ref, o_ref):
        # x_ref: (N, Cin, HW)  w_ref: (Cout, Cin)  gamma/beta: (Cout, 1)  o_ref: (N, Cout, HW)
        w = w_ref[...]
        total = jnp.zeros((c_out, 1), jnp.float32)
        total_sq = jnp.zeros((c_out, 1), jnp.float32)
        for n in range(n_imgs):                                       # static unroll (small N)
            y = jnp.dot(w, x_ref[n].astype(jnp.float32),
                        preferred_element_type=jnp.float32)           # (Cout, HW)
            total = total + jnp.sum(y, axis=1, keepdims=True)
            total_sq = total_sq + jnp.sum(y * y, axis=1, keepdims=True)
        mean = total / m_total
        var = jnp.maximum(total_sq / m_total - mean * mean, 0.0)      # biased variance (BN)
        inv_std = 1.0 / jnp.sqrt(var + bn_eps)
        scale = gamma_ref[...] * inv_std
        shift = beta_ref[...] - mean * scale
        w_s = w * scale                                               # fold BN scale into weights
        for n in range(n_imgs):
            y = jnp.dot(w_s, x_ref[n].astype(jnp.float32),
                        preferred_element_type=jnp.float32)
            o_ref[n] = jnp.maximum(y + shift, 0.0).astype(o_ref.dtype)

    return kernel


# ----------------------------- wrapper ---------------------------------------------


def conv_block_forward(x_nchw, conv_w, conv_b, gamma, beta, *,
                       force_two_pass=False, max_tile_m=None):
    """Forward of ConvBlock: Conv2d(k=1,s=1,p=0) + training-mode BatchNorm2d + ReLU.

    x_nchw: (N, Cin, H, W); conv_w: (Cout, Cin, 1, 1); conv_b/gamma/beta: (Cout,).
    """
    N, Cin, H, W = x_nchw.shape
    Cout = conv_w.shape[0]
    assert conv_w.shape[1:] == (Cin, 1, 1), "ConvBlock Pallas kernel expects a 1x1 conv"
    # Training-mode BN subtracts the batch mean (which contains the conv bias), so the
    # bias cancels exactly in the forward output and is dropped here.
    del conv_b
    HW = H * W
    M = N * HW

    # NCHW is already (N, Cin, H*W): no transpose, no dtype cast (DMA native dtype).
    x3 = x_nchw.reshape(N, Cin, HW)
    w_mat = conv_w.reshape(Cout, Cin).astype(jnp.float32)
    gamma_f = gamma.astype(jnp.float32)
    beta_f = beta.astype(jnp.float32)

    x_item = jnp.dtype(x_nchw.dtype).itemsize
    out_item = x_item
    out_dtype = x_nchw.dtype

    # -------- fused path: whole problem resident in VMEM (avoids 2nd HBM read of x) ----
    vmem_cap = _vmem_capacity_bytes()
    fused_need = (N * Cin * HW * x_item            # x resident
                  + N * Cout * HW * out_item       # output resident
                  + 2 * Cout * HW * 4              # f32 pre-activation working set
                  + (1 << 20))
    if (not force_two_pass) and N <= 8 and fused_need <= int(0.4 * vmem_cap):
        fused_limit = min(int(0.75 * vmem_cap), max(fused_need + (8 << 20), 16 << 20))
        out3 = pl.pallas_call(
            _make_fused_kernel(N, Cout, HW, BN_EPS),
            out_shape=jax.ShapeDtypeStruct((N, Cout, HW), out_dtype),
            compiler_params=pltpu.CompilerParams(vmem_limit_bytes=fused_limit),
        )(x3, w_mat, gamma_f.reshape(Cout, 1), beta_f.reshape(Cout, 1))
        return out3.reshape(N, Cout, H, W)

    # -------- tiled two-pass path (large spatial tiles, no pad / slice round trips) ----
    per_lane_bytes = 2 * (Cin * x_item + Cout * out_item)    # pass-2 double-buffered blocks
    tile_m = min(MAX_TILE_M, max(LANE, TILED_BLOCK_BUDGET // per_lane_bytes))
    if max_tile_m is not None:
        tile_m = min(tile_m, max_tile_m)
    tile_m = max(LANE, (tile_m // LANE) * LANE)
    tile_m = min(tile_m, _round_up(HW, LANE))
    n_tiles = -(-HW // tile_m)
    needs_mask = (HW % tile_m) != 0

    # Extra 'parallel' split of the spatial axis so both v7x TensorCores stay busy when
    # the batch alone can't be split evenly (no-op on single-TC v5e/v6e).
    n_mo = 2 if (N % 2 == 1 and n_tiles % 2 == 0 and n_tiles >= 2) else 1
    n_mi = n_tiles // n_mo

    x_spec1 = pl.BlockSpec((1, Cin, tile_m), lambda n, mo, mi: (n, 0, mo * n_mi + mi))
    w_spec1 = pl.BlockSpec((Cout, Cin), lambda n, mo, mi: (0, 0))
    acc_spec = pl.BlockSpec((1, 1, Cout, 1), lambda n, mo, mi: (n, mo, 0, 0))

    stats_cost = pl.CostEstimate(
        flops=2 * M * Cin * Cout + 3 * M * Cout,
        transcendentals=0,
        bytes_accessed=M * Cin * x_item + Cout * Cin * 4 + 2 * N * n_mo * Cout * 4)

    part_sum, part_sq = pl.pallas_call(
        _make_stats_kernel(HW, tile_m, n_mi, needs_mask),
        out_shape=(jax.ShapeDtypeStruct((N, n_mo, Cout, 1), jnp.float32),
                   jax.ShapeDtypeStruct((N, n_mo, Cout, 1), jnp.float32)),
        grid=(N, n_mo, n_mi),
        in_specs=[x_spec1, w_spec1],
        out_specs=(acc_spec, acc_spec),
        compiler_params=pltpu.CompilerParams(
            dimension_semantics=("parallel", "parallel", "arbitrary"),
            vmem_limit_bytes=TILED_VMEM_LIMIT),
        cost_estimate=stats_cost,
    )(x3, w_mat)

    # Tiny cross-image/core combine + per-channel factor folding (negligible XLA work).
    total_sum = jnp.sum(part_sum, axis=(0, 1))[:, 0]     # (Cout,)
    total_sq = jnp.sum(part_sq, axis=(0, 1))[:, 0]       # (Cout,)
    mean = total_sum / M
    var = jnp.maximum(total_sq / M - mean * mean, 0.0)   # biased variance (BN normalization)
    inv_std = 1.0 / jnp.sqrt(var + BN_EPS)
    scale = gamma_f * inv_std                            # (Cout,)
    shift = (beta_f - mean * scale).reshape(Cout, 1)
    w_scaled = w_mat * scale.reshape(Cout, 1)            # fold BN scale into the conv weight

    norm_cost = pl.CostEstimate(
        flops=2 * M * Cin * Cout + 2 * M * Cout,
        transcendentals=0,
        bytes_accessed=M * Cin * x_item + M * Cout * out_item + Cout * (Cin + 1) * 4)

    out3 = pl.pallas_call(
        _normalize_kernel,
        out_shape=jax.ShapeDtypeStruct((N, Cout, HW), out_dtype),
        grid=(N, n_tiles),
        in_specs=[pl.BlockSpec((1, Cin, tile_m), lambda n, m: (n, 0, m)),
                  pl.BlockSpec((Cout, Cin), lambda n, m: (0, 0)),
                  pl.BlockSpec((Cout, 1), lambda n, m: (0, 0))],
        out_specs=pl.BlockSpec((1, Cout, tile_m), lambda n, m: (n, 0, m)),
        compiler_params=pltpu.CompilerParams(
            dimension_semantics=("parallel", "parallel"),
            vmem_limit_bytes=TILED_VMEM_LIMIT),
        cost_estimate=norm_cost,
    )(x3, w_scaled, shift)

    return out3.reshape(N, Cout, H, W)
    # TODO(synk): BN running_mean/running_var update (momentum=0.9997) is a training-only
    # side effect that does not affect the forward output; it is omitted here.


def conv_block_ref(x, w, b, gamma, beta):
    """Pure-JAX reference mirroring the PyTorch ConvBlock.forward (training-mode BN)."""
    y = jax.lax.conv_general_dilated(
        x, w, window_strides=(1, 1), padding="VALID",
        dimension_numbers=("NCHW", "OIHW", "NCHW"))
    y = y + b.reshape(1, -1, 1, 1)
    mean = jnp.mean(y, axis=(0, 2, 3), keepdims=True)
    var = jnp.var(y, axis=(0, 2, 3), keepdims=True)
    yn = (y - mean) / jnp.sqrt(var + BN_EPS)
    return jnp.maximum(yn * gamma.reshape(1, -1, 1, 1) + beta.reshape(1, -1, 1, 1), 0.0)


if __name__ == "__main__":
    key = jax.random.PRNGKey(0)
    kx, kw, kb, kg, kbeta = jax.random.split(key, 5)

    # Case 1: shapes implied by the module defaults (exercises the fused VMEM-resident path).
    N, C_IN, C_OUT, H, W = 2, 4, 8, 16, 16
    x = jax.random.normal(kx, (N, C_IN, H, W), dtype=jnp.float32)
    conv_w = jax.random.normal(kw, (C_OUT, C_IN, 1, 1), dtype=jnp.float32) * 0.5
    conv_b = jax.random.normal(kb, (C_OUT,), dtype=jnp.float32) * 0.1
    gamma = 1.0 + 0.1 * jax.random.normal(kg, (C_OUT,), dtype=jnp.float32)
    beta = 0.1 * jax.random.normal(kbeta, (C_OUT,), dtype=jnp.float32)

    ref = conv_block_ref(x, conv_w, conv_b, gamma, beta)

    out_fused = jax.block_until_ready(conv_block_forward(x, conv_w, conv_b, gamma, beta))
    assert out_fused.shape == (N, C_OUT, H, W)
    assert jnp.allclose(out_fused, ref, atol=1e-3, rtol=1e-3), "fused path mismatch"

    # Same inputs through the tiled two-pass path (validates that code path too).
    out_tiled = jax.block_until_ready(
        conv_block_forward(x, conv_w, conv_b, gamma, beta, force_two_pass=True))
    assert jnp.allclose(out_tiled, ref, atol=1e-3, rtol=1e-3), "tiled path mismatch"

    # Case 2: odd batch + non-128-aligned spatial size with a forced small tile:
    # exercises partial-block masking, partial output writeback and the (n, m_outer)
    # parallel split of the stats pass.
    N2, H2, W2 = 1, 15, 15          # HW = 225 -> 2 tiles of 128 with a partial tail
    x2 = jax.random.normal(kx, (N2, C_IN, H2, W2), dtype=jnp.float32)
    ref2 = conv_block_ref(x2, conv_w, conv_b, gamma, beta)
    out2 = jax.block_until_ready(
        conv_block_forward(x2, conv_w, conv_b, gamma, beta,
                           force_two_pass=True, max_tile_m=128))
    assert out2.shape == (N2, C_OUT, H2, W2)
    assert jnp.allclose(out2, ref2, atol=1e-3, rtol=1e-3), "masked/partial-tile mismatch"

    print("KERNEL_OK")
</pallas_src>

<mosaic_0001>
module attributes {stable_mosaic.version = 11 : i64} {
  func.func @kernel(%arg0: memref<2x4x256xf32, #tpu.memory_space<vmem>>, %arg1: memref<8x4xf32, #tpu.memory_space<vmem>>, %arg2: memref<8x1xf32, #tpu.memory_space<vmem>>, %arg3: memref<8x1xf32, #tpu.memory_space<vmem>>, %arg4: memref<2x8x256xf32, #tpu.memory_space<vmem>>) attributes {dimension_semantics = [], scalar_prefetch = 0 : i64, scratch_operands = 0 : i64, tpu.core_type = #tpu.core_type<tc>} {
    %c0 = arith.constant 0 : index
    %c0_0 = arith.constant 0 : index
    %0 = vector.load %arg1[%c0, %c0_0] : memref<8x4xf32, #tpu.memory_space<vmem>>, vector<8x4xf32>
    %cst = arith.constant 0.000000e+00 : f32
    %1 = vector.broadcast %cst : f32 to vector<8x1xf32>
    %cst_1 = arith.constant 0.000000e+00 : f32
    %2 = vector.broadcast %cst_1 : f32 to vector<8x1xf32>
    %c0_2 = arith.constant 0 : index
    %c0_3 = arith.constant 0 : index
    %c0_4 = arith.constant 0 : index
    %3 = vector.load %arg0[%c0_2, %c0_3, %c0_4] : memref<2x4x256xf32, #tpu.memory_space<vmem>>, vector<1x4x256xf32>
    %4 = vector.shape_cast %3 : vector<1x4x256xf32> to vector<4x256xf32>
    %cst_5 = arith.constant dense<0.000000e+00> : vector<8x256xf32>
    %5 = tpu.matmul %0, %4, %cst_5 {dimension_numbers = #tpu.dot_dimension_numbers<[1], [0], [0], [1], [0, 0, 1, 1], [], []>} : vector<8x4xf32>, vector<4x256xf32>, vector<8x256xf32> -> vector<8x256xf32>
    %cst_6 = arith.constant dense<0.000000e+00> : vector<8xf32>
    %6 = vector.multi_reduction <add>, %5, %cst_6 [1] : vector<8x256xf32> to vector<8xf32>
    %7 = vector.shape_cast %6 : vector<8xf32> to vector<8x1xf32>
    %8 = arith.addf %1, %7 : vector<8x1xf32>
    %9 = arith.mulf %5, %5 : vector<8x256xf32>
    %cst_7 = arith.constant dense<0.000000e+00> : vector<8xf32>
    %10 = vector.multi_reduction <add>, %9, %cst_7 [1] : vector<8x256xf32> to vector<8xf32>
    %11 = vector.shape_cast %10 : vector<8xf32> to vector<8x1xf32>
    %12 = arith.addf %2, %11 : vector<8x1xf32>
    %c1 = arith.constant 1 : index
    %c0_8 = arith.constant 0 : index
    %c0_9 = arith.constant 0 : index
    %13 = vector.load %arg0[%c1, %c0_8, %c0_9] : memref<2x4x256xf32, #tpu.memory_space<vmem>>, vector<1x4x256xf32>
    %14 = vector.shape_cast %13 : vector<1x4x256xf32> to vector<4x256xf32>
    %cst_10 = arith.constant dense<0.000000e+00> : vector<8x256xf32>
    %15 = tpu.matmul %0, %14, %cst_10 {dimension_numbers = #tpu.dot_dimension_numbers<[1], [0], [0], [1], [0, 0, 1, 1], [], []>} : vector<8x4xf32>, vector<4x256xf32>, vector<8x256xf32> -> vector<8x256xf32>
    %cst_11 = arith.constant dense<0.000000e+00> : vector<8xf32>
    %16 = vector.multi_reduction <add>, %15, %cst_11 [1] : vector<8x256xf32> to vector<8xf32>
    %17 = vector.shape_cast %16 : vector<8xf32> to vector<8x1xf32>
    %18 = arith.addf %8, %17 : vector<8x1xf32>
    %19 = arith.mulf %15, %15 : vector<8x256xf32>
    %cst_12 = arith.constant dense<0.000000e+00> : vector<8xf32>
    %20 = vector.multi_reduction <add>, %19, %cst_12 [1] : vector<8x256xf32> to vector<8xf32>
    %21 = vector.shape_cast %20 : vector<8xf32> to vector<8x1xf32>
    %22 = arith.addf %12, %21 : vector<8x1xf32>
    %cst_13 = arith.constant 5.120000e+02 : f32
    %23 = vector.broadcast %cst_13 : f32 to vector<8x1xf32>
    %24 = arith.divf %18, %23 : vector<8x1xf32>
    %cst_14 = arith.constant 5.120000e+02 : f32
    %25 = vector.broadcast %cst_14 : f32 to vector<8x1xf32>
    %26 = arith.divf %22, %25 : vector<8x1xf32>
    %27 = arith.mulf %24, %24 : vector<8x1xf32>
    %28 = arith.subf %26, %27 : vector<8x1xf32>
    %cst_15 = arith.constant 0.000000e+00 : f32
    %29 = vector.broadcast %cst_15 : f32 to vector<8x1xf32>
    %30 = arith.maximumf %28, %29 : vector<8x1xf32>
    %cst_16 = arith.constant 4.000000e-05 : f32
    %31 = vector.broadcast %cst_16 : f32 to vector<8x1xf32>
    %32 = arith.addf %30, %31 : vector<8x1xf32>
    %33 = math.sqrt %32 : vector<8x1xf32>
    %cst_17 = arith.constant 1.000000e+00 : f32
    %34 = vector.broadcast %cst_17 : f32 to vector<8x1xf32>
    %35 = arith.divf %34, %33 : vector<8x1xf32>
    %c0_18 = arith.constant 0 : index
    %c0_19 = arith.constant 0 : index
    %36 = vector.load %arg2[%c0_18, %c0_19] : memref<8x1xf32, #tpu.memory_space<vmem>>, vector<8x1xf32>
    %37 = arith.mulf %36, %35 : vector<8x1xf32>
    %c0_20 = arith.constant 0 : index
    %c0_21 = arith.constant 0 : index
    %38 = vector.load %arg3[%c0_20, %c0_21] : memref<8x1xf32, #tpu.memory_space<vmem>>, vector<8x1xf32>
    %39 = arith.mulf %24, %37 : vector<8x1xf32>
    %40 = arith.subf %38, %39 : vector<8x1xf32>
    %41 = vector.broadcast %37 : vector<8x1xf32> to vector<8x4xf32>
    %42 = arith.mulf %0, %41 : vector<8x4xf32>
    %c0_22 = arith.constant 0 : index
    %c0_23 = arith.constant 0 : index
    %c0_24 = arith.constant 0 : index
    %43 = vector.load %arg0[%c0_22, %c0_23, %c0_24] : memref<2x4x256xf32, #tpu.memory_space<vmem>>, vector<1x4x256xf32>
    %44 = vector.shape_cast %43 : vector<1x4x256xf32> to vector<4x256xf32>
    %cst_25 = arith.constant dense<0.000000e+00> : vector<8x256xf32>
    %45 = tpu.matmul %42, %44, %cst_25 {dimension_numbers = #tpu.dot_dimension_numbers<[1], [0], [0], [1], [0, 0, 1, 1], [], []>} : vector<8x4xf32>, vector<4x256xf32>, vector<8x256xf32> -> vector<8x256xf32>
    %46 = vector.broadcast %40 : vector<8x1xf32> to vector<8x256xf32>
    %47 = arith.addf %45, %46 : vector<8x256xf32>
    %cst_26 = arith.constant 0.000000e+00 : f32
    %48 = vector.broadcast %cst_26 : f32 to vector<8x256xf32>
    %49 = arith.maximumf %47, %48 : vector<8x256xf32>
    %c0_27 = arith.constant 0 : index
    %c0_28 = arith.constant 0 : index
    %c0_29 = arith.constant 0 : index
    %50 = vector.load %arg4[%c0_27, %c0_28, %c0_29] : memref<2x8x256xf32, #tpu.memory_space<vmem>>, vector<1x8x256xf32>
    %51 = vector.shape_cast %50 : vector<1x8x256xf32> to vector<8x256xf32>
    %52 = vector.shape_cast %49 : vector<8x256xf32> to vector<1x8x256xf32>
    tpu.vector_store %arg4[%c0_27, %c0_28, %c0_29], %52 {strides = array<i32>} : memref<2x8x256xf32, #tpu.memory_space<vmem>>, vector<1x8x256xf32>,
    %c1_30 = arith.constant 1 : index
    %c0_31 = arith.constant 0 : index
    %c0_32 = arith.constant 0 : index
    %53 = vector.load %arg0[%c1_30, %c0_31, %c0_32] : memref<2x4x256xf32, #tpu.memory_space<vmem>>, vector<1x4x256xf32>
    %54 = vector.shape_cast %53 : vector<1x4x256xf32> to vector<4x256xf32>
    %cst_33 = arith.constant dense<0.000000e+00> : vector<8x256xf32>
    %55 = tpu.matmul %42, %54, %cst_33 {dimension_numbers = #tpu.dot_dimension_numbers<[1], [0], [0], [1], [0, 0, 1, 1], [], []>} : vector<8x4xf32>, vector<4x256xf32>, vector<8x256xf32> -> vector<8x256xf32>
    %56 = vector.broadcast %40 : vector<8x1xf32> to vector<8x256xf32>
    %57 = arith.addf %55, %56 : vector<8x256xf32>
    %cst_34 = arith.constant 0.000000e+00 : f32
    %58 = vector.broadcast %cst_34 : f32 to vector<8x256xf32>
    %59 = arith.maximumf %57, %58 : vector<8x256xf32>
    %c1_35 = arith.constant 1 : index
    %c0_36 = arith.constant 0 : index
    %c0_37 = arith.constant 0 : index
    %60 = vector.load %arg4[%c1_35, %c0_36, %c0_37] : memref<2x8x256xf32, #tpu.memory_space<vmem>>, vector<1x8x256xf32>
    %61 = vector.shape_cast %60 : vector<1x8x256xf32> to vector<8x256xf32>
    %62 = vector.shape_cast %59 : vector<8x256xf32> to vector<1x8x256xf32>
    tpu.vector_store %arg4[%c1_35, %c0_36, %c0_37], %62 {strides = array<i32>} : memref<2x8x256xf32, #tpu.memory_space<vmem>>, vector<1x8x256xf32>,
    return
  }
}

</mosaic_0001>

<llo_original>
// kernel: tpu_custom_call.1
$region0: #{tpu_custom_call.1}
  #allocation0 [shape = 'u32[]', space=smem, size = 0x4, offset = 0x4, fixed_abs, tag = 'smem constant byte address 0x4 - core index']
  #allocation1 [shape = 'u32[144,128]{1,0:T(1,128)}', space=vmem, size = 0x12000, scoped, tag = 'internal scratch']
  %s0 = inlined_call_operand.vmem [shape: f32[2,4,256], index: 0, kind: input, shape index: {}]
  %s1 = inlined_call_operand.vmem [shape: f32[8,4], index: 1, kind: input, shape index: {}]
  %s2 = inlined_call_operand.vmem [shape: f32[8,1], index: 2, kind: input, shape index: {}]
  %s3 = inlined_call_operand.vmem [shape: f32[8,1], index: 3, kind: input, shape index: {}]
  %s4 = inlined_call_operand.hbm [shape: f32[2,8,256], index: 4, kind: output, shape index: {}]
  %s5 = sld [smem:[#allocation0]]
  $region26: #{tpu_custom_call.1} parent=0
    _
  %s7 = ssub.s32 1, %s5
  %s8 = scalar_select 0, %s7, %s5
  $region1: #{tpu_custom_call.1} parent=0
    #allocation2 [shape = 'u8[16384]{0}', space=vmem, size = 0x4000, scoped, tag = 'output window, operand 0, single buffered']
    #allocation3 [shape = 's32[1]{0}', space=sflag, size = 0x4, scoped, tag = 'scoped memory for tpu_custom_call.1']
    %9 = vsyncpa [#allocation3], 0
    // Predicated region
    $region2: #{tpu_custom_call.1} parent=1 // pred_check
      _
    $region3: #{tpu_custom_call.1} parent=1 // pred_check_branch
      %11 = sbr.rel (0) target = $region5
    $region4: #{tpu_custom_call.1} parent=1 // pred_region
      _
    $region5: #{tpu_custom_call.1} parent=1 // pred_fallthru
      _
    // Predicated region
    $region6: #{tpu_custom_call.1} parent=1 // pred_check
      _
    $region7: #{tpu_custom_call.1} parent=1 // pred_check_branch
      %13 = sbr.rel (0) target = $region9
    $region8: #{tpu_custom_call.1} parent=1 // pred_region
      _
    $region9: #{tpu_custom_call.1} parent=1 // pred_fallthru
      _
    // Predicated region
    $region10: #{tpu_custom_call.1} parent=1 // pred_check
      _
    $region11: #{tpu_custom_call.1} parent=1 // pred_check_branch
      %15 = sbr.rel (0) target = $region13
    $region12: #{tpu_custom_call.1} parent=1 // pred_region
      _
    $region13: #{tpu_custom_call.1} parent=1 // pred_fallthru
      _
    // Predicated region
    $region14: #{tpu_custom_call.1} parent=1 // pred_check
      _
    $region15: #{tpu_custom_call.1} parent=1 // pred_check_branch
      %17 = sbr.rel (0) target = $region17
    $region16: #{tpu_custom_call.1} parent=1 // pred_region
      _
    $region17: #{tpu_custom_call.1} parent=1 // pred_fallthru
      _
    %v18 = vld [vmem:[%s1] sm:$0xff]
    %v19 = vld [vmem:[%s0] sm:$0xff]
    %v21 = vcombine.high %v19, %v19
    %vm22 = vcmask 31744
    %v24 = vsel %vm22, %v18, 0
    %vm26 = vcmask 1043456
    %v27 = vsel %vm26, %v19, 0
    %v29 = vsel %vm26, %v21, 0
    %31 = vmatprep.subr.mxu0 %v29
    %32 = vmatpush1.msra.mxu0 %v27
    %33 = vmatprep.subr.mxu0 0.0
    %34 = vmatpush1.msra.mxu0 0.0
    %35 = vmatprep.subr.mxu0 0.0
    %36 = vmatpush1.msra.mxu0 0.0
    %37 = vmatprep.subr.mxu0 0.0
    %38 = vmatpush1.msra.mxu0 0.0
    %39 = vmatprep.subr.mxu0 0.0
    %40 = vmatpush1.msra.mxu0 0.0
    %41 = vmatprep.subr.mxu0 0.0
    %42 = vmatpush1.msra.mxu0 0.0
    %43 = vmatprep.subr.mxu0 0.0
    %44 = vmatpush1.msra.mxu0 0.0
    %45 = vmatprep.subr.mxu0 0.0
    %46 = vmatpush1.msra.mxu0 0.0
    %47 = vmatprep.subr.mxu0 0.0
    %48 = vmatpush1.msra.mxu0 0.0
    %49 = vmatprep.subr.mxu0 0.0
    %50 = vmatpush1.msra.mxu0 0.0
    %51 = vmatprep.subr.mxu0 0.0
    %52 = vmatpush1.msra.mxu0 0.0
    %53 = vmatprep.subr.mxu0 0.0
    %54 = vmatpush1.msra.mxu0 0.0
    %55 = vmatprep.subr.mxu0 0.0
    %56 = vmatpush1.msra.mxu0 0.0
    %57 = vmatprep.subr.mxu0 0.0
    %58 = vmatpush1.msra.mxu0 0.0
    %59 = vmatprep.subr.mxu0 0.0
    %60 = vmatpush1.msra.mxu0 0.0
    %61 = vmatprep.subr.mxu0 0.0
    %62 = vmatpush1.msra.mxu0 0.0
    %63 = vmatprep.subr.mxu0 0.0
    %64 = vmatpush1.msra.mxu0 0.0
    %65 = vmatprep.subr.mxu0 0.0
    %66 = vmatpush1.msra.mxu0 0.0
    %67 = vmatprep.subr.mxu0 0.0
    %68 = vmatpush1.msra.mxu0 0.0
    %69 = vmatprep.subr.mxu0 0.0
    %70 = vmatpush1.msra.mxu0 0.0
    %71 = vmatprep.subr.mxu0 0.0
    %72 = vmatpush1.msra.mxu0 0.0
    %73 = vmatprep.subr.mxu0 0.0
    %74 = vmatpush1.msra.mxu0 0.0
    %75 = vmatprep.subr.mxu0 0.0
    %76 = vmatpush1.msra.mxu0 0.0
    %77 = vmatprep.subr.mxu0 0.0
    %78 = vmatpush1.msra.mxu0 0.0
    %79 = vmatprep.subr.mxu0 0.0
    %80 = vmatpush1.msra.mxu0 0.0
    %81 = vmatprep.subr.mxu0 0.0
    %82 = vmatpush1.msra.mxu0 0.0
    %83 = vmatprep.subr.mxu0 0.0
    %84 = vmatpush1.msra.mxu0 0.0
    %85 = vmatprep.subr.mxu0 0.0
    %86 = vmatpush1.msra.mxu0 0.0
    %87 = vmatprep.subr.mxu0 0.0
    %88 = vmatpush1.msra.mxu0 0.0
    %89 = vmatprep.subr.mxu0 0.0
    %90 = vmatpush1.msra.mxu0 0.0
    %91 = vmatprep.subr.mxu0 0.0
    %92 = vmatpush1.msra.mxu0 0.0
    %93 = vmatprep.subr.mxu0 0.0
    %94 = vmatpush1.msra.mxu0 0.0
    %95 = vmatprep.mubr.f32.mxu0 0.0
    %96 = vmatmul.mubr.f32.gmra.mrb[0].mxu0 %v24
    %v97 = vpop.f32.mrb[0].mxu0
    %v98 = vadd.f32 0.0, %v97
    %v99 = vpop.f32.mrb[0].mxu0
    %v100 = vadd.f32 0.0, %v99
    %101 = vdwg.mxu0
    %v102 = vadd.f32 %v98, %v100
    %103 = vadd.xlane.f32.xlu0 %v102
    %v104 = vpop.xlane.xlu0 %103
    %v105 = vadd.f32 %v104, 0.0
    %v106 = vmul.f32 %v98, %v98
    %v107 = vmul.f32 %v100, %v100
    %v108 = vadd.f32 %v106, %v107
    %109 = vadd.xlane.f32.xlu0 %v108
    %v110 = vpop.xlane.xlu0 %109
    %v111 = vadd.f32 %v110, 0.0
    %s112 = scalar_lea.vmem %s0, 8
    %v113 = vld [vmem:[%s112] sm:$0xff]
    %v115 = vcombine.high %v113, %v113
    %v116 = vsel %vm26, %v113, 0
    %v118 = vsel %vm26, %v115, 0
    %120 = vmatprep.subr.mxu0 %v118
    %121 = vmatpush1.msra.mxu0 %v116
    %122 = vmatprep.subr.mxu0 0.0
    %123 = vmatpush1.msra.mxu0 0.0
    %124 = vmatprep.subr.mxu0 0.0
    %125 = vmatpush1.msra.mxu0 0.0
    %126 = vmatprep.subr.mxu0 0.0
    %127 = vmatpush1.msra.mxu0 0.0
    %128 = vmatprep.subr.mxu0 0.0
    %129 = vmatpush1.msra.mxu0 0.0
    %130 = vmatprep.subr.mxu0 0.0
    %131 = vmatpush1.msra.mxu0 0.0
    %132 = vmatprep.subr.mxu0 0.0
    %133 = vmatpush1.msra.mxu0 0.0
    %134 = vmatprep.subr.mxu0 0.0
    %135 = vmatpush1.msra.mxu0 0.0
    %136 = vmatprep.subr.mxu0 0.0
    %137 = vmatpush1.msra.mxu0 0.0
    %138 = vmatprep.subr.mxu0 0.0
    %139 = vmatpush1.msra.mxu0 0.0
    %140 = vmatprep.subr.mxu0 0.0
    %141 = vmatpush1.msra.mxu0 0.0
    %142 = vmatprep.subr.mxu0 0.0
    %143 = vmatpush1.msra.mxu0 0.0
    %144 = vmatprep.subr.mxu0 0.0
    %145 = vmatpush1.msra.mxu0 0.0
    %146 = vmatprep.subr.mxu0 0.0
    %147 = vmatpush1.msra.mxu0 0.0
    %148 = vmatprep.subr.mxu0 0.0
    %149 = vmatpush1.msra.mxu0 0.0
    %150 = vmatprep.subr.mxu0 0.0
    %151 = vmatpush1.msra.mxu0 0.0
    %152 = vmatprep.subr.mxu0 0.0
    %153 = vmatpush1.msra.mxu0 0.0
    %154 = vmatprep.subr.mxu0 0.0
    %155 = vmatpush1.msra.mxu0 0.0
    %156 = vmatprep.subr.mxu0 0.0
    %157 = vmatpush1.msra.mxu0 0.0
    %158 = vmatprep.subr.mxu0 0.0
    %159 = vmatpush1.msra.mxu0 0.0
    %160 = vmatprep.subr.mxu0 0.0
    %161 = vmatpush1.msra.mxu0 0.0
    %162 = vmatprep.subr.mxu0 0.0
    %163 = vmatpush1.msra.mxu0 0.0
    %164 = vmatprep.subr.mxu0 0.0
    %165 = vmatpush1.msra.mxu0 0.0
    %166 = vmatprep.subr.mxu0 0.0
    %167 = vmatpush1.msra.mxu0 0.0
    %168 = vmatprep.subr.mxu0 0.0
    %169 = vmatpush1.msra.mxu0 0.0
    %170 = vmatprep.subr.mxu0 0.0
    %171 = vmatpush1.msra.mxu0 0.0
    %172 = vmatprep.subr.mxu0 0.0
    %173 = vmatpush1.msra.mxu0 0.0
    %174 = vmatprep.subr.mxu0 0.0
    %175 = vmatpush1.msra.mxu0 0.0
    %176 = vmatprep.subr.mxu0 0.0
    %177 = vmatpush1.msra.mxu0 0.0
    %178 = vmatprep.subr.mxu0 0.0
    %179 = vmatpush1.msra.mxu0 0.0
    %180 = vmatprep.subr.mxu0 0.0
    %181 = vmatpush1.msra.mxu0 0.0
    %182 = vmatprep.subr.mxu0 0.0
    %183 = vmatpush1.msra.mxu0 0.0
    %184 = vmatprep.mubr.f32.mxu0 0.0
    %185 = vmatmul.mubr.f32.gmra.mrb[0].mxu0 %v24
    %v186 = vpop.f32.mrb[0].mxu0
    %v187 = vadd.f32 0.0, %v186
    %v188 = vpop.f32.mrb[0].mxu0
    %v189 = vadd.f32 0.0, %v188
    %190 = vdwg.mxu0
    %v191 = vadd.f32 %v187, %v189
    %192 = vadd.xlane.f32.xlu0 %v191
    %v193 = vpop.xlane.xlu0 %192
    %v194 = vadd.f32 %v105, %v193
    %v195 = vmul.f32 %v187, %v187
    %v196 = vmul.f32 %v189, %v189
    %v197 = vadd.f32 %v195, %v196
    %198 = vadd.xlane.f32.xlu0 %v197
    %v199 = vpop.xlane.xlu0 %198
    %v200 = vadd.f32 %v111, %v199
    %v201 = vrcp.pop 512.0
    %v202 = vmul.f32 %v194, %v201
    %v203 = vmul.f32 %v200, %v201
    %v204 = vmul.f32 %v202, %v202
    %v205 = vsub.f32 %v203, %v204
    %v206 = vmax.f32 %v205, 0.0
    %v207 = vadd.f32 %v206, 4e-05
    %v208 = vrsqrt.pop %v207
    %v209 = vmul.f32 %v207, %v208
    %vm210 = vcmp.eq.f32.partialorder %v207, inf
    %v211 = vsel %vm210, %v207, %v209
    %vm212 = vcmp.eq.f32.partialorder %v207, 0.0
    %v213 = vand.u32 %v207, 2147483648
    %v214 = vsel %vm212, %v213, %v211
    %v215 = vrcp.pop %v214
    %v216 = vmul.f32 1.0, %v215
    %v217 = vld [vmem:[%s2] sm:$0xff]
    %v218 = vmul.f32 %v217, %v216
    %v219 = vld [vmem:[%s3] sm:$0xff]
    %v220 = vmul.f32 %v202, %v218
    %v221 = vsub.f32 %v219, %v220
    %223 = vset.pattern.permute.xlu0 0
    %224 = vperm.xlu0 %223, %v218
    %v225 = vpop.permute.xlu0 %224
    %v227 = vmul.f32 %v18, %v225
    %229 = vset.pattern.permute.xlu0 0
    %230 = vperm.xlu0 %229, %v221
    %v231 = vpop.permute.xlu0 %230
    %v234 = vsel %vm22, %v227, 0
    %236 = vmatprep.subr.mxu0 %v29
    %237 = vmatpush1.msra.mxu0 %v27
    %238 = vmatprep.subr.mxu0 0.0
    %239 = vmatpush1.msra.mxu0 0.0
    %240 = vmatprep.subr.mxu0 0.0
    %241 = vmatpush1.msra.mxu0 0.0
    %242 = vmatprep.subr.mxu0 0.0
    %243 = vmatpush1.msra.mxu0 0.0
    %244 = vmatprep.subr.mxu0 0.0
    %245 = vmatpush1.msra.mxu0 0.0
    %246 = vmatprep.subr.mxu0 0.0
    %247 = vmatpush1.msra.mxu0 0.0
    %248 = vmatprep.subr.mxu0 0.0
    %249 = vmatpush1.msra.mxu0 0.0
    %250 = vmatprep.subr.mxu0 0.0
    %251 = vmatpush1.msra.mxu0 0.0
    %252 = vmatprep.subr.mxu0 0.0
    %253 = vmatpush1.msra.mxu0 0.0
    %254 = vmatprep.subr.mxu0 0.0
    %255 = vmatpush1.msra.mxu0 0.0
    %256 = vmatprep.subr.mxu0 0.0
    %257 = vmatpush1.msra.mxu0 0.0
    %258 = vmatprep.subr.mxu0 0.0
    %259 = vmatpush1.msra.mxu0 0.0
    %260 = vmatprep.subr.mxu0 0.0
    %261 = vmatpush1.msra.mxu0 0.0
    %262 = vmatprep.subr.mxu0 0.0
    %263 = vmatpush1.msra.mxu0 0.0
    %264 = vmatprep.subr.mxu0 0.0
    %265 = vmatpush1.msra.mxu0 0.0
    %266 = vmatprep.subr.mxu0 0.0
    %267 = vmatpush1.msra.mxu0 0.0
    %268 = vmatprep.subr.mxu0 0.0
    %269 = vmatpush1.msra.mxu0 0.0
    %270 = vmatprep.subr.mxu0 0.0
    %271 = vmatpush1.msra.mxu0 0.0
    %272 = vmatprep.subr.mxu0 0.0
    %273 = vmatpush1.msra.mxu0 0.0
    %274 = vmatprep.subr.mxu0 0.0
    %275 = vmatpush1.msra.mxu0 0.0
    %276 = vmatprep.subr.mxu0 0.0
    %277 = vmatpush1.msra.mxu0 0.0
    %278 = vmatprep.subr.mxu0 0.0
    %279 = vmatpush1.msra.mxu0 0.0
    %280 = vmatprep.subr.mxu0 0.0
    %281 = vmatpush1.msra.mxu0 0.0
    %282 = vmatprep.subr.mxu0 0.0
    %283 = vmatpush1.msra.mxu0 0.0
    %284 = vmatprep.subr.mxu0 0.0
    %285 = vmatpush1.msra.mxu0 0.0
    %286 = vmatprep.subr.mxu0 0.0
    %287 = vmatpush1.msra.mxu0 0.0
    %288 = vmatprep.subr.mxu0 0.0
    %289 = vmatpush1.msra.mxu0 0.0
    %290 = vmatprep.subr.mxu0 0.0
    %291 = vmatpush1.msra.mxu0 0.0
    %292 = vmatprep.subr.mxu0 0.0
    %293 = vmatpush1.msra.mxu0 0.0
    %294 = vmatprep.subr.mxu0 0.0
    %295 = vmatpush1.msra.mxu0 0.0
    %296 = vmatprep.subr.mxu0 0.0
    %297 = vmatpush1.msra.mxu0 0.0
    %298 = vmatprep.subr.mxu0 0.0
    %299 = vmatpush1.msra.mxu0 0.0
    %300 = vmatprep.mubr.f32.mxu0 0.0
    %301 = vmatmul.mubr.f32.gmra.mrb[0].mxu0 %v234
    %v302 = vpop.f32.mrb[0].mxu0
    %v303 = vadd.f32 %v231, %v302
    %v304 = vpop.f32.mrb[0].mxu0
    %v305 = vadd.f32 %v231, %v304
    %306 = vdwg.mxu0
    %v307 = vmax.f32 %v303, 0.0
    %v308 = vmax.f32 %v305, 0.0
    %309 = vst [vmem:[#allocation2] sm:$0xff] %v307
    %310 = vst [vmem:[#allocation2 + $0x8] sm:$0xff] %v308
    %v311 = vld [vmem:[%s112] sm:$0xff]
    %v313 = vcombine.high %v311, %v311
    %v314 = vsel %vm26, %v311, 0
    %v316 = vsel %vm26, %v313, 0
    %318 = vmatprep.subr.mxu0 %v316
    %319 = vmatpush1.msra.mxu0 %v314
    %320 = vmatprep.subr.mxu0 0.0
    %321 = vmatpush1.msra.mxu0 0.0
    %322 = vmatprep.subr.mxu0 0.0
    %323 = vmatpush1.msra.mxu0 0.0
    %324 = vmatprep.subr.mxu0 0.0
    %325 = vmatpush1.msra.mxu0 0.0
    %326 = vmatprep.subr.mxu0 0.0
    %327 = vmatpush1.msra.mxu0 0.0
    %328 = vmatprep.subr.mxu0 0.0
    %329 = vmatpush1.msra.mxu0 0.0
    %330 = vmatprep.subr.mxu0 0.0
    %331 = vmatpush1.msra.mxu0 0.0
    %332 = vmatprep.subr.mxu0 0.0
    %333 = vmatpush1.msra.mxu0 0.0
    %334 = vmatprep.subr.mxu0 0.0
    %335 = vmatpush1.msra.mxu0 0.0
    %336 = vmatprep.subr.mxu0 0.0
    %337 = vmatpush1.msra.mxu0 0.0
    %338 = vmatprep.subr.mxu0 0.0
    %339 = vmatpush1.msra.mxu0 0.0
    %340 = vmatprep.subr.mxu0 0.0
    %341 = vmatpush1.msra.mxu0 0.0
    %342 = vmatprep.subr.mxu0 0.0
    %343 = vmatpush1.msra.mxu0 0.0
    %344 = vmatprep.subr.mxu0 0.0
    %345 = vmatpush1.msra.mxu0 0.0
    %346 = vmatprep.subr.mxu0 0.0
    %347 = vmatpush1.msra.mxu0 0.0
    %348 = vmatprep.subr.mxu0 0.0
    %349 = vmatpush1.msra.mxu0 0.0
    %350 = vmatprep.subr.mxu0 0.0
    %351 = vmatpush1.msra.mxu0 0.0
    %352 = vmatprep.subr.mxu0 0.0
    %353 = vmatpush1.msra.mxu0 0.0
    %354 = vmatprep.subr.mxu0 0.0
    %355 = vmatpush1.msra.mxu0 0.0
    %356 = vmatprep.subr.mxu0 0.0
    %357 = vmatpush1.msra.mxu0 0.0
    %358 = vmatprep.subr.mxu0 0.0
    %359 = vmatpush1.msra.mxu0 0.0
    %360 = vmatprep.subr.mxu0 0.0
    %361 = vmatpush1.msra.mxu0 0.0
    %362 = vmatprep.subr.mxu0 0.0
    %363 = vmatpush1.msra.mxu0 0.0
    %364 = vmatprep.subr.mxu0 0.0
    %365 = vmatpush1.msra.mxu0 0.0
    %366 = vmatprep.subr.mxu0 0.0
    %367 = vmatpush1.msra.mxu0 0.0
    %368 = vmatprep.subr.mxu0 0.0
    %369 = vmatpush1.msra.mxu0 0.0
    %370 = vmatprep.subr.mxu0 0.0
    %371 = vmatpush1.msra.mxu0 0.0
    %372 = vmatprep.subr.mxu0 0.0
    %373 = vmatpush1.msra.mxu0 0.0
    %374 = vmatprep.subr.mxu0 0.0
    %375 = vmatpush1.msra.mxu0 0.0
    %376 = vmatprep.subr.mxu0 0.0
    %377 = vmatpush1.msra.mxu0 0.0
    %378 = vmatprep.subr.mxu0 0.0
    %379 = vmatpush1.msra.mxu0 0.0
    %380 = vmatprep.subr.mxu0 0.0
    %381 = vmatpush1.msra.mxu0 0.0
    %382 = vmatprep.mubr.f32.mxu0 0.0
    %383 = vmatmul.mubr.f32.gmra.mrb[0].mxu0 %v234
    %v384 = vpop.f32.mrb[0].mxu0
    %v385 = vadd.f32 %v231, %v384
    %v386 = vpop.f32.mrb[0].mxu0
    %v387 = vadd.f32 %v231, %v386
    %388 = vdwg.mxu0
    %v389 = vmax.f32 %v385, 0.0
    %v390 = vmax.f32 %v387, 0.0
    %s391 = scalar_lea.vmem [#allocation2], 16
    %392 = vst [vmem:[%s391] sm:$0xff] %v389
    %393 = vst [vmem:[%s391 + $0x8] sm:$0xff] %v390
    // Predicated region
    $region18: #{tpu_custom_call.1} parent=1 // pred_check
      _
    $region19: #{tpu_custom_call.1} parent=1 // pred_check_branch
      %395 = sbr.rel (0) target = $region21
    $region20: #{tpu_custom_call.1} parent=1 // pred_region
      %s397 = ssub.s32 512, 512
      %398 = vsyncadd [#allocation3], %s397
      %s399 = sshll.u32 [#allocation2], 4
      %s400 = int_to_ptr.vmem [resolvable:$true] %s399
      %405 = dma.vmem_to_hbm [thread:$0]  %s400, 512, %s4, [#allocation3], 256, 256, 16
    $region21: #{tpu_custom_call.1} parent=1 // pred_fallthru
      _
    // Predicated region
    $region22: #{tpu_custom_call.1} parent=1 // pred_check
      _
    $region23: #{tpu_custom_call.1} parent=1 // pred_check_branch
      %407 = sbr.rel (0) target = $region25
    $region24: #{tpu_custom_call.1} parent=1 // pred_region
      %408 = dma.done [#allocation3], 512
    $region25: #{tpu_custom_call.1} parent=1 // pred_fallthru
      _
    %409 = vsyncpa [#allocation3], 1

</llo_original>
